<compile_context>
chip_gen: v6e
topology: v6e:2x2x1
jax: 0.10.0
libtpu: 0.0.40
codegen_flags: <defaults>
</compile_context>

<pallas_src>
import functools

import jax
import jax.numpy as jnp
from jax.experimental import pallas as pl
from jax.experimental.pallas import tpu as pltpu


def _dura_kernel(h_ref, r_ref, t_ref, o_ref, acc_ref, *,
                 n_rows, block_n, steps_per_core, needs_mask):
    c = pl.program_id(0)          # core split (parallel axis)
    i = pl.program_id(1)          # streaming step (arbitrary axis)

    @pl.when(i == 0)
    def _init():
        acc_ref[...] = jnp.zeros_like(acc_ref)

    # Tile-local f32 upcast (inputs arrive in their native dtype).
    h = h_ref[...].astype(jnp.float32)
    r = r_ref[...].astype(jnp.float32)
    t = t_ref[...].astype(jnp.float32)
    contrib = (h * h + t * t) * (0.5 + 1.5 * (r * r))   # fused DURA_W term

    if needs_mask:
        # Zero rows past the true batch: ragged tail of the last real block
        # plus any clamped duplicate tiles from the 2-way core split.
        row_start = (c * steps_per_core + i) * block_n
        row_ids = row_start + jax.lax.broadcasted_iota(
            jnp.int32, contrib.shape, 0)
        contrib = jnp.where(row_ids < n_rows, contrib, 0.0)

    # Fold batch tiles into a vreg-aligned (8, D) accumulator: pure VPU vreg
    # adds, no cross-lane reduction until the single finalize below.
    acc_ref[...] += jnp.sum(contrib.reshape(block_n // 8, 8, -1), axis=0)

    @pl.when(i == pl.num_programs(1) - 1)
    def _finalize():
        o_ref[0, 0] = jnp.sum(acc_ref[...])


def _choose_tiling(n, d, dtype):
    """Pick (block_n, num_par, steps_per_core, vmem_limit_bytes)."""
    try:
        vmem_cap = int(pltpu.get_tpu_info().vmem_capacity_bytes)
    except Exception:
        vmem_cap = 64 * 1024 * 1024            # v7x floor; safe everywhere
    # Double-buffered input budget: ~48 MiB on 128-MiB-VMEM parts (v5e/v6e),
    # ~32 MiB on v7x (64 MiB physical).
    budget = min(48 * 1024 * 1024, vmem_cap // 2)
    itemsize = jnp.dtype(dtype).itemsize
    per_row = 3 * 2 * d * itemsize             # 3 inputs x 2 pipeline buffers
    block_n = max(32, (budget // per_row) // 32 * 32)   # 32 covers f32/bf16/i8
    block_n = min(block_n, max(32, ((n + 31) // 32) * 32))
    grid_n = pl.cdiv(n, block_n)
    num_par = 2 if grid_n >= 2 else 1          # v7x: 2 TCs; serial elsewhere
    steps_per_core = pl.cdiv(grid_n, num_par)
    vmem_limit = int(min(vmem_cap, per_row * block_n + 16 * 1024 * 1024))
    return block_n, num_par, steps_per_core, vmem_limit


@functools.partial(
    jax.jit,
    static_argnames=("block_n", "num_par", "steps_per_core", "vmem_limit"))
def _dura_factor_norm(h, r, t, *, block_n, num_par, steps_per_core, vmem_limit):
    """sum((h^2 + t^2) * (0.5 + 1.5 r^2)) over one (N, D) factor."""
    n, d = h.shape
    grid_n = pl.cdiv(n, block_n)
    needs_mask = (n % block_n != 0) or (num_par * steps_per_core != grid_n)

    kernel = functools.partial(
        _dura_kernel, n_rows=n, block_n=block_n,
        steps_per_core=steps_per_core, needs_mask=needs_mask)

    def in_map(c, i):
        # Clamp so duplicate tiles from the core split never DMA out of
        # bounds (they are fully masked in-kernel => contribute exactly 0).
        return (jnp.minimum(c * steps_per_core + i, grid_n - 1), 0)

    in_spec = pl.BlockSpec((block_n, d), in_map)
    itemsize = jnp.dtype(h.dtype).itemsize

    out = pl.pallas_call(
        kernel,
        out_shape=jax.ShapeDtypeStruct((num_par, 1), jnp.float32),
        grid_spec=pltpu.PrefetchScalarGridSpec(
            num_scalar_prefetch=0,
            grid=(num_par, steps_per_core),
            in_specs=[in_spec, in_spec, in_spec],
            out_specs=pl.BlockSpec((1, 1), lambda c, i: (c, 0),
                                   memory_space=pltpu.SMEM),
            scratch_shapes=[pltpu.VMEM((8, d), jnp.float32)],
        ),
        compiler_params=pltpu.CompilerParams(
            dimension_semantics=("parallel", "arbitrary"),
            vmem_limit_bytes=vmem_limit,
        ),
        cost_estimate=pl.CostEstimate(
            flops=8 * n * d,
            transcendentals=0,
            bytes_accessed=3 * n * d * itemsize + num_par * 4,
        ),
    )(h, r, t)
    return jnp.sum(out)


def dura_w(factors, weight: float):
    """JAX/Pallas equivalent of DURA_W.forward(factors).

    NOTE: intentionally divides by h.shape[0] of the LAST factor, matching the
    PyTorch implementation's use of the loop variable that survives the loop.
    """
    norm = jnp.float32(0.0)
    n_last = None
    for (h, r, t) in factors:
        assert h.ndim == 2 and h.shape == r.shape == t.shape, (
            "each factor must be three identically shaped (N, D) embeddings")
        block_n, num_par, steps_per_core, vmem_limit = _choose_tiling(
            h.shape[0], h.shape[1], h.dtype)
        norm = norm + _dura_factor_norm(
            h, r, t, block_n=block_n, num_par=num_par,
            steps_per_core=steps_per_core, vmem_limit=vmem_limit)
        n_last = h.shape[0]
    return jnp.float32(weight) * norm / jnp.float32(n_last)


def _dura_w_ref(factors, weight: float):
    """Pure-JAX reference for correctness checking."""
    norm = 0.0
    n_last = None
    for (h, r, t) in factors:
        h = h.astype(jnp.float32)
        r = r.astype(jnp.float32)
        t = t.astype(jnp.float32)
        norm = norm + 0.5 * jnp.sum(t ** 2 + h ** 2)
        norm = norm + 1.5 * jnp.sum(h ** 2 * r ** 2 + t ** 2 * r ** 2)
        n_last = h.shape[0]
    return weight * norm / n_last


if __name__ == "__main__":
    key = jax.random.PRNGKey(0)
    weight = 0.05

    keys = jax.random.split(key, 9)
    # Factors 1 & 2: (10, 128) f32 — exercises the masked partial-tile path.
    # Factor 3: (12, 256) bf16 — exercises per-factor rank and native-dtype
    # streaming with in-kernel f32 upcast.
    factors = [
        (jax.random.normal(keys[0], (10, 128), jnp.float32),
         jax.random.normal(keys[1], (10, 128), jnp.float32),
         jax.random.normal(keys[2], (10, 128), jnp.float32)),
        (jax.random.normal(keys[3], (10, 128), jnp.float32),
         jax.random.normal(keys[4], (10, 128), jnp.float32),
         jax.random.normal(keys[5], (10, 128), jnp.float32)),
        (jax.random.normal(keys[6], (12, 256), jnp.bfloat16),
         jax.random.normal(keys[7], (12, 256), jnp.bfloat16),
         jax.random.normal(keys[8], (12, 256), jnp.bfloat16)),
    ]

    out = jax.block_until_ready(dura_w(factors, weight))
    ref = jax.block_until_ready(_dura_w_ref(factors, weight))
    assert jnp.allclose(out, ref, rtol=1e-4, atol=1e-4), (out, ref)

    print("KERNEL_OK")
</pallas_src>

<mosaic_0001>
module attributes {stable_mosaic.version = 11 : i64} {
  func.func @_dura_kernel(%arg0: i32, %arg1: i32, %arg2: memref<32x128xf32, #tpu.memory_space<vmem>>, %arg3: memref<32x128xf32, #tpu.memory_space<vmem>>, %arg4: memref<32x128xf32, #tpu.memory_space<vmem>>, %arg5: memref<1x1xf32, #tpu.memory_space<smem>>, %arg6: memref<8x128xf32, #tpu.memory_space<vmem>>) attributes {dimension_semantics = [#tpu.dimension_semantics<parallel>, #tpu.dimension_semantics<arbitrary>], iteration_bounds = array<i64: 1, 1>, scalar_prefetch = 0 : i64, scratch_operands = 1 : i64, tpu.core_type = #tpu.core_type<tc>, window_params = [{transform_indices = @transform_0, window_bounds = array<i64: 32, 128>}, {transform_indices = @transform_1, window_bounds = array<i64: 32, 128>}, {transform_indices = @transform_2, window_bounds = array<i64: 32, 128>}, {transform_indices = @transform_3, window_bounds = array<i64: 1, 1>}]} {
    %c0_i32 = arith.constant 0 : i32
    %0 = arith.cmpi eq, %arg1, %c0_i32 : i32
    %1 = arith.extui %0 : i1 to i32
    %c0_i32_0 = arith.constant 0 : i32
    %2 = arith.cmpi ne, %1, %c0_i32_0 : i32
    scf.if %2 {
      %cst_15 = arith.constant 0.000000e+00 : f32
      %33 = vector.broadcast %cst_15 : f32 to vector<8x128xf32>
      %c0_16 = arith.constant 0 : index
      %c0_17 = arith.constant 0 : index
      %34 = vector.load %arg6[%c0_16, %c0_17] : memref<8x128xf32, #tpu.memory_space<vmem>>, vector<8x128xf32>
      tpu.vector_store %arg6[%c0_16, %c0_17], %33 {strides = array<i32>} : memref<8x128xf32, #tpu.memory_space<vmem>>, vector<8x128xf32>,
    } else {
    }
    %c0 = arith.constant 0 : index
    %c0_1 = arith.constant 0 : index
    %3 = vector.load %arg2[%c0, %c0_1] : memref<32x128xf32, #tpu.memory_space<vmem>>, vector<32x128xf32>
    %c0_2 = arith.constant 0 : index
    %c0_3 = arith.constant 0 : index
    %4 = vector.load %arg3[%c0_2, %c0_3] : memref<32x128xf32, #tpu.memory_space<vmem>>, vector<32x128xf32>
    %c0_4 = arith.constant 0 : index
    %c0_5 = arith.constant 0 : index
    %5 = vector.load %arg4[%c0_4, %c0_5] : memref<32x128xf32, #tpu.memory_space<vmem>>, vector<32x128xf32>
    %6 = arith.mulf %3, %3 : vector<32x128xf32>
    %7 = arith.mulf %5, %5 : vector<32x128xf32>
    %8 = arith.addf %6, %7 : vector<32x128xf32>
    %9 = arith.mulf %4, %4 : vector<32x128xf32>
    %cst = arith.constant 1.500000e+00 : f32
    %10 = vector.broadcast %cst : f32 to vector<32x128xf32>
    %11 = arith.mulf %10, %9 : vector<32x128xf32>
    %cst_6 = arith.constant 5.000000e-01 : f32
    %12 = vector.broadcast %cst_6 : f32 to vector<32x128xf32>
    %13 = arith.addf %12, %11 : vector<32x128xf32>
    %14 = arith.mulf %8, %13 : vector<32x128xf32>
    %c1_i32 = arith.constant 1 : i32
    %15 = arith.muli %arg0, %c1_i32 : i32
    %16 = arith.addi %15, %arg1 : i32
    %c32_i32 = arith.constant 32 : i32
    %17 = arith.muli %16, %c32_i32 : i32
    %18 = tpu.iota {dimensions = array<i32: 0>} : vector<32x128xi32>
    %19 = vector.broadcast %17 : i32 to vector<32x128xi32>
    %20 = arith.addi %19, %18 : vector<32x128xi32>
    %c10_i32 = arith.constant 10 : i32
    %21 = vector.broadcast %c10_i32 : i32 to vector<32x128xi32>
    %22 = arith.cmpi slt, %20, %21 : vector<32x128xi32>
    %cst_7 = arith.constant 0.000000e+00 : f32
    %23 = vector.broadcast %cst_7 : f32 to vector<32x128xf32>
    %24 = arith.select %22, %14, %23 : vector<32x128xi1>, vector<32x128xf32>
    %c0_8 = arith.constant 0 : index
    %c0_9 = arith.constant 0 : index
    %25 = vector.load %arg6[%c0_8, %c0_9] : memref<8x128xf32, #tpu.memory_space<vmem>>, vector<8x128xf32>
    %26 = vector.shape_cast %24 : vector<32x128xf32> to vector<4x8x128xf32>
    %cst_10 = arith.constant dense<0.000000e+00> : vector<8x128xf32>
    %27 = vector.multi_reduction <add>, %26, %cst_10 [0] : vector<4x8x128xf32> to vector<8x128xf32>
    %28 = arith.addf %25, %27 : vector<8x128xf32>
    %c0_11 = arith.constant 0 : index
    %c0_12 = arith.constant 0 : index
    %29 = vector.load %arg6[%c0_11, %c0_12] : memref<8x128xf32, #tpu.memory_space<vmem>>, vector<8x128xf32>
    tpu.vector_store %arg6[%c0_11, %c0_12], %28 {strides = array<i32>} : memref<8x128xf32, #tpu.memory_space<vmem>>, vector<8x128xf32>,
    %c0_i32_13 = arith.constant 0 : i32
    %30 = arith.cmpi eq, %arg1, %c0_i32_13 : i32
    %31 = arith.extui %30 : i1 to i32
    %c0_i32_14 = arith.constant 0 : i32
    %32 = arith.cmpi ne, %31, %c0_i32_14 : i32
    scf.if %32 {
      %c0_15 = arith.constant 0 : index
      %c0_16 = arith.constant 0 : index
      %33 = vector.load %arg6[%c0_15, %c0_16] : memref<8x128xf32, #tpu.memory_space<vmem>>, vector<8x128xf32>
      %34 = vector.shape_cast %33 : vector<8x128xf32> to vector<1x8x128xf32>
      %cst_17 = arith.constant dense<0.000000e+00> : vector<1xf32>
      %35 = vector.multi_reduction <add>, %34, %cst_17 [1, 2] : vector<1x8x128xf32> to vector<1xf32>
      %36 = vector.shape_cast %35 : vector<1xf32> to vector<1x1x1xf32>
      %37 = vector.extract %36[0, 0, 0] : f32 from vector<1x1x1xf32>
      %c0_18 = arith.constant 0 : index
      %c0_19 = arith.constant 0 : index
      %38 = memref.load %arg5[%c0_18, %c0_19] : memref<1x1xf32, #tpu.memory_space<smem>>
      memref.store %37, %arg5[%c0_18, %c0_19] : memref<1x1xf32, #tpu.memory_space<smem>>
    } else {
    }
    return
  }
  func.func @transform_0(%arg0: i32, %arg1: i32) -> (i32, i32) {
    %c1_i32 = arith.constant 1 : i32
    %0 = arith.muli %arg0, %c1_i32 : i32
    %1 = arith.addi %0, %arg1 : i32
    %c0_i32 = arith.constant 0 : i32
    %2 = arith.minsi %1, %c0_i32 : i32
    %c0_i32_0 = arith.constant 0 : i32
    %c0_i32_1 = arith.constant 0 : i32
    return %2, %c0_i32_0 : i32, i32
  }
  func.func @transform_1(%arg0: i32, %arg1: i32) -> (i32, i32) {
    %c1_i32 = arith.constant 1 : i32
    %0 = arith.muli %arg0, %c1_i32 : i32
    %1 = arith.addi %0, %arg1 : i32
    %c0_i32 = arith.constant 0 : i32
    %2 = arith.minsi %1, %c0_i32 : i32
    %c0_i32_0 = arith.constant 0 : i32
    %c0_i32_1 = arith.constant 0 : i32
    return %2, %c0_i32_0 : i32, i32
  }
  func.func @transform_2(%arg0: i32, %arg1: i32) -> (i32, i32) {
    %c1_i32 = arith.constant 1 : i32
    %0 = arith.muli %arg0, %c1_i32 : i32
    %1 = arith.addi %0, %arg1 : i32
    %c0_i32 = arith.constant 0 : i32
    %2 = arith.minsi %1, %c0_i32 : i32
    %c0_i32_0 = arith.constant 0 : i32
    %c0_i32_1 = arith.constant 0 : i32
    return %2, %c0_i32_0 : i32, i32
  }
  func.func @transform_3(%arg0: i32, %arg1: i32) -> (i32, i32) {
    %c0_i32 = arith.constant 0 : i32
    %c0_i32_0 = arith.constant 0 : i32
    return %arg0, %c0_i32 : i32, i32
  }
}

</mosaic_0001>

<llo_original>
// kernel: _dura_factor_norm.1
$region0: #{_dura_factor_norm.1}
  #allocation0 [shape = 'u32[]', space=smem, size = 0x4, offset = 0x4, fixed_abs, tag = 'smem constant byte address 0x4 - core index']
  #allocation1 [shape = 'u32[144,128]{1,0:T(1,128)}', space=vmem, size = 0x12000, scoped, tag = 'internal scratch']
  #allocation2 [shape = 'f32[8,128]{1,0:T(8,128)}', space=vmem, size = 0x1000, scoped, tag = 'scratch operand']
  %s0 = inlined_call_operand.hbm [shape: f32[10,128], index: 0, kind: input, shape index: {}]
  %s1 = inlined_call_operand.hbm [shape: f32[10,128], index: 1, kind: input, shape index: {}]
  %s2 = inlined_call_operand.hbm [shape: f32[10,128], index: 2, kind: input, shape index: {}]
  %s3 = inlined_call_operand.hbm [shape: f32[1,1], index: 3, kind: output, shape index: {}]
  %s4 = sld [smem:[#allocation0]]
  $region42: #{_dura_factor_norm.1} parent=0
    _
  %s6 = ssub.s32 1, %s4
  %s7 = scalar_select 0, %s6, %s4
  $region1: #{_dura_factor_norm.1} parent=0
    #allocation3 [shape = 'u8[16384]{0}', space=vmem, size = 0x4000, scoped, tag = 'input window, operand 0, single buffered']
    #allocation4 [shape = 's32[1]{0}', space=sflag, size = 0x4, scoped, tag = 'scoped memory for _dura_factor_norm.1']
    #allocation5 [shape = 's32[1]{0}', space=sflag, size = 0x4, scoped, tag = 'scoped memory for _dura_factor_norm.1']
    #allocation6 [shape = 'u8[16384]{0}', space=vmem, size = 0x4000, scoped, tag = 'input window, operand 1, single buffered']
    #allocation7 [shape = 's32[1]{0}', space=sflag, size = 0x4, scoped, tag = 'scoped memory for _dura_factor_norm.1']
    #allocation8 [shape = 'u8[16384]{0}', space=vmem, size = 0x4000, scoped, tag = 'input window, operand 2, single buffered']
    #allocation9 [shape = 'u8[512]{0}', space=smem, size = 0x200, scoped, tag = 'output window, operand 0, single buffered']
    %8 = vsyncpa [#allocation4], 0
    %9 = vsyncpa [#allocation7], 0
    %10 = vsyncpa [#allocation5], 0
    // Predicated region
    $region2: #{_dura_factor_norm.1} parent=1 // pred_check
      _
    $region3: #{_dura_factor_norm.1} parent=1 // pred_check_branch
      %12 = sbr.rel (0) target = $region5
    $region4: #{_dura_factor_norm.1} parent=1 // pred_region
      %s13 = sadd.s32 0, 0
      %p14 = scmp.lt.s32.totalorder %s13, 0
      %s15 = scalar_select %p14, %s13, 0
      %s16 = smul.u32 4, %s15
      %s17 = ssub.s32 2, %s16
      %s18 = smul.u32 128, %s17
      %s20 = ssub.s32 512, %s18
      %21 = vsyncadd [#allocation4], %s20
      %p22 = scmp.ne.s32.totalorder 0, %s18
      %s23 = smul.addr %s16, 128
      %s24 = scalar_lea.hbm %s0, %s23
      %s25 = smul.u32 8, %s17
      %s26 = sshll.u32 [#allocation3], 4
      %s27 = int_to_ptr.vmem [resolvable:$true] %s26
      %s28 = sshll.u32 %s25, 4
      %32 = dma.hbm_to_vmem [thread:$0]  (%p22), %s24, %s28, %s27, [#allocation4], 128, 128, 8
    $region5: #{_dura_factor_norm.1} parent=1 // pred_fallthru
      _
    // Predicated region
    $region6: #{_dura_factor_norm.1} parent=1 // pred_check
      _
    $region7: #{_dura_factor_norm.1} parent=1 // pred_check_branch
      %34 = sbr.rel (0) target = $region9
    $region8: #{_dura_factor_norm.1} parent=1 // pred_region
      %s35 = sadd.s32 0, 0
      %p36 = scmp.lt.s32.totalorder %s35, 0
      %s37 = scalar_select %p36, %s35, 0
      %s38 = smul.u32 4, %s37
      %s39 = ssub.s32 2, %s38
      %s40 = smul.u32 128, %s39
      %s42 = ssub.s32 512, %s40
      %43 = vsyncadd [#allocation7], %s42
      %p44 = scmp.ne.s32.totalorder 0, %s40
      %s45 = smul.addr %s38, 128
      %s46 = scalar_lea.hbm %s1, %s45
      %s47 = smul.u32 8, %s39
      %s48 = sshll.u32 [#allocation6], 4
      %s49 = int_to_ptr.vmem [resolvable:$true] %s48
      %s50 = sshll.u32 %s47, 4
      %54 = dma.hbm_to_vmem [thread:$0]  (%p44), %s46, %s50, %s49, [#allocation7], 128, 128, 8
    $region9: #{_dura_factor_norm.1} parent=1 // pred_fallthru
      _
    // Predicated region
    $region10: #{_dura_factor_norm.1} parent=1 // pred_check
      _
    $region11: #{_dura_factor_norm.1} parent=1 // pred_check_branch
      %56 = sbr.rel (0) target = $region13
    $region12: #{_dura_factor_norm.1} parent=1 // pred_region
      %s57 = sadd.s32 0, 0
      %p58 = scmp.lt.s32.totalorder %s57, 0
      %s59 = scalar_select %p58, %s57, 0
      %s60 = smul.u32 4, %s59
      %s61 = ssub.s32 2, %s60
      %s62 = smul.u32 128, %s61
      %s64 = ssub.s32 512, %s62
      %65 = vsyncadd [#allocation7], %s64
      %p66 = scmp.ne.s32.totalorder 0, %s62
      %s67 = smul.addr %s60, 128
      %s68 = scalar_lea.hbm %s2, %s67
      %s69 = smul.u32 8, %s61
      %s70 = sshll.u32 [#allocation8], 4
      %s71 = int_to_ptr.vmem [resolvable:$true] %s70
      %s72 = sshll.u32 %s69, 4
      %76 = dma.hbm_to_vmem [thread:$0]  (%p66), %s68, %s72, %s71, [#allocation7], 128, 128, 8
    $region13: #{_dura_factor_norm.1} parent=1 // pred_fallthru
      _
    // Predicated region
    $region14: #{_dura_factor_norm.1} parent=1 // pred_check
      _
    $region15: #{_dura_factor_norm.1} parent=1 // pred_check_branch
      %78 = sbr.rel (0) target = $region17
    $region16: #{_dura_factor_norm.1} parent=1 // pred_region
      %79 = dma.done [#allocation4], 512
    $region17: #{_dura_factor_norm.1} parent=1 // pred_fallthru
      _
    // Predicated region
    $region18: #{_dura_factor_norm.1} parent=1 // pred_check
      _
    $region19: #{_dura_factor_norm.1} parent=1 // pred_check_branch
      %81 = sbr.rel (0) target = $region21
    $region20: #{_dura_factor_norm.1} parent=1 // pred_region
      %82 = dma.done [#allocation7], 512
    $region21: #{_dura_factor_norm.1} parent=1 // pred_fallthru
      _
    // Predicated region
    $region22: #{_dura_factor_norm.1} parent=1 // pred_check
      _
    $region23: #{_dura_factor_norm.1} parent=1 // pred_check_branch
      %84 = sbr.rel (0) target = $region25
    $region24: #{_dura_factor_norm.1} parent=1 // pred_region
      %85 = dma.done [#allocation7], 512
    $region25: #{_dura_factor_norm.1} parent=1 // pred_fallthru
      _
    %s86 = sadd.s32 0, 0
    %p87 = scmp.lt.s32.totalorder %s86, 0
    %s88 = scalar_select %p87, %s86, 0
    %s89 = smul.u32 4, %s88
    %s90 = ssub.s32 2, %s89
    %s91 = smul.u32 128, %s90
    %s92 = sadd.s32 0, 0
    %p93 = scmp.lt.s32.totalorder %s92, 0
    %s94 = scalar_select %p93, %s92, 0
    %s95 = smul.u32 4, %s94
    %s96 = ssub.s32 2, %s95
    %s97 = smul.u32 128, %s96
    %s98 = sadd.s32 0, 0
    %p99 = scmp.lt.s32.totalorder %s98, 0
    %s100 = scalar_select %p99, %s98, 0
    %s101 = smul.u32 4, %s100
    %s102 = ssub.s32 2, %s101
    %s103 = smul.u32 128, %s102
    %p104 = scmp.eq.s32.totalorder 0, 0
    // Predicated region
    $region26: #{_dura_factor_norm.1} parent=1 // pred_check
      %p105 = pneg %p104
    $region27: #{_dura_factor_norm.1} parent=1 // pred_check_branch
      %107 = sbr.rel (%p105) target = $region29
    $region28: #{_dura_factor_norm.1} parent=1 // pred_region
      %108 = vst [vmem:[#allocation2] sm:$0xff] 0.0
    $region29: #{_dura_factor_norm.1} parent=1 // pred_fallthru
      _
    %v109 = vld [vmem:[#allocation3] sm:$0xff]
    %v110 = vld [vmem:[#allocation3 + $0x8] sm:$0xff]
    %v111 = vld [vmem:[#allocation3 + $0x10] sm:$0xff]
    %v112 = vld [vmem:[#allocation3 + $0x18] sm:$0xff]
    %v113 = vld [vmem:[#allocation6] sm:$0xff]
    %v114 = vld [vmem:[#allocation6 + $0x8] sm:$0xff]
    %v115 = vld [vmem:[#allocation6 + $0x10] sm:$0xff]
    %v116 = vld [vmem:[#allocation6 + $0x18] sm:$0xff]
    %v117 = vld [vmem:[#allocation8] sm:$0xff]
    %v118 = vld [vmem:[#allocation8 + $0x8] sm:$0xff]
    %v119 = vld [vmem:[#allocation8 + $0x10] sm:$0xff]
    %v120 = vld [vmem:[#allocation8 + $0x18] sm:$0xff]
    %v121 = vmul.f32 %v109, %v109
    %v122 = vmul.f32 %v110, %v110
    %v123 = vmul.f32 %v111, %v111
    %v124 = vmul.f32 %v112, %v112
    %v125 = vmul.f32 %v117, %v117
    %v126 = vmul.f32 %v118, %v118
    %v127 = vmul.f32 %v119, %v119
    %v128 = vmul.f32 %v120, %v120
    %v129 = vadd.f32 %v121, %v125
    %v130 = vadd.f32 %v122, %v126
    %v131 = vadd.f32 %v123, %v127
    %v132 = vadd.f32 %v124, %v128
    %v133 = vmul.f32 %v113, %v113
    %v134 = vmul.f32 %v114, %v114
    %v135 = vmul.f32 %v115, %v115
    %v136 = vmul.f32 %v116, %v116
    %v137 = vmul.f32 %v133, 1.5
    %v138 = vmul.f32 %v134, 1.5
    %v139 = vmul.f32 %v135, 1.5
    %v140 = vmul.f32 %v136, 1.5
    %v141 = vadd.f32 %v137, 0.5
    %v142 = vadd.f32 %v138, 0.5
    %v143 = vadd.f32 %v139, 0.5
    %v144 = vadd.f32 %v140, 0.5
    %v145 = vmul.f32 %v129, %v141
    %v146 = vmul.f32 %v130, %v142
    %v147 = vmul.f32 %v131, %v143
    %v148 = vmul.f32 %v132, %v144
    %s149 = sadd.s32 0, 0
    %s150 = smul.u32 %s149, 32
    %v151 = vlaneseq
    %v152 = vshrl.u32 %v151, 7
    %v153 = vadd.s32 %v152, 8
    %v154 = vadd.s32 %v152, 16
    %v155 = vadd.s32 %v152, 24
    %v156 = vstv %s150
    %v157 = vadd.s32 %v156, %v152
    %v158 = vadd.s32 %v156, %v153
    %v159 = vadd.s32 %v156, %v154
    %v160 = vadd.s32 %v156, %v155
    %vm161 = vcmp.lt.s32.totalorder %v157, 10
    %vm162 = vcmp.lt.s32.totalorder %v158, 10
    %vm163 = vcmp.lt.s32.totalorder %v159, 10
    %vm164 = vcmp.lt.s32.totalorder %v160, 10
    %v165 = vsel %vm161, %v145, 0.0
    %v166 = vsel %vm162, %v146, 0.0
    %v167 = vsel %vm163, %v147, 0.0
    %v168 = vsel %vm164, %v148, 0.0
    %v169 = vld [vmem:[#allocation2] sm:$0xff]
    %v170 = vadd.f32 %v165, %v166
    %v171 = vadd.f32 %v170, %v167
    %v172 = vadd.f32 %v171, %v168
    %v173 = vadd.f32 %v169, %v172
    %174 = vst [vmem:[#allocation2] sm:$0xff] %v173
    // Predicated region
    $region30: #{_dura_factor_norm.1} parent=1 // pred_check
      %p175 = pneg %p104
    $region31: #{_dura_factor_norm.1} parent=1 // pred_check_branch
      %177 = sbr.rel (%p175) target = $region33
    $region32: #{_dura_factor_norm.1} parent=1 // pred_region
      %v178 = vld [vmem:[#allocation2] sm:$0xff]
      %179 = vadd.xlane.f32.xlu0 %v178
      %v180 = vpop.xlane.xlu0 %179
      %v181 = vrot.slane %v180, 4
      %v182 = vadd.f32 %v180, %v181
      %v183 = vrot.slane %v182, 2
      %v184 = vadd.f32 %v182, %v183
      %v185 = vrot.slane %v184, 1
      %v186 = vadd.f32 %v184, %v185
      %s187 = vtos %v186
      %s188 = scalar_lea.smem [#allocation9], 0
      %189 = sst [smem:[%s188]] %s187
    $region33: #{_dura_factor_norm.1} parent=1 // pred_fallthru
      _
    // Predicated region
    $region34: #{_dura_factor_norm.1} parent=1 // pred_check
      _
    $region35: #{_dura_factor_norm.1} parent=1 // pred_check_branch
      %191 = sbr.rel (0) target = $region37
    $region36: #{_dura_factor_norm.1} parent=1 // pred_region
      %s193 = ssub.s32 16, 16
      %194 = vsyncadd [#allocation5], %s193
      %197 = dma.smem_to_hbm [#allocation9], 16, %s3, [#allocation5]
    $region37: #{_dura_factor_norm.1} parent=1 // pred_fallthru
      _
    // Predicated region
    $region38: #{_dura_factor_norm.1} parent=1 // pred_check
      _
    $region39: #{_dura_factor_norm.1} parent=1 // pred_check_branch
      %199 = sbr.rel (0) target = $region41
    $region40: #{_dura_factor_norm.1} parent=1 // pred_region
      %200 = dma.done [#allocation5], 16
    $region41: #{_dura_factor_norm.1} parent=1 // pred_fallthru
      _
    %201 = sfence
    %202 = vsyncpa [#allocation4], 1
    %203 = vsyncpa [#allocation7], 1
    %204 = vsyncpa [#allocation5], 1

</llo_original>
